<compile_context>
chip_gen: v7x
topology: tpu7x:2x2x1
jax: 0.10.0
libtpu: 0.0.40
codegen_flags: <defaults>
</compile_context>

<pallas_src>
import functools

import jax
import jax.numpy as jnp
from jax.experimental import pallas as pl
from jax.experimental.pallas import tpu as pltpu


# Live double-buffered block budget (fits v7x's 64 MiB VMEM with headroom;
# v5e/v6e have 128 MiB) and the explicit scoped-VMEM limit.
_TILE_VMEM_BUDGET_BYTES = 28 * 1024 * 1024
_VMEM_LIMIT_BYTES = 48 * 1024 * 1024


def _round_up(n, m):
    return ((n + m - 1) // m) * m


def _cdiv(a, b):
    return -(-a // b)


def _pick_tiling(B, D, itemsize):
    """Pick (tile_b, padded_B, num_tiles): biggest balanced row tile under budget."""
    # Sublane packing: 8 rows for 32-bit, 16 for bf16, 32 for int8/fp8.
    align = 8 if itemsize >= 4 else (32 // itemsize)
    # Per block row: 2x double-buffered input + 2x output in the I/O dtype,
    # plus ~2 f32 temporaries (cast + normalized intermediate).
    per_row = D * (4 * itemsize + 8)
    max_rows = max(align, (_TILE_VMEM_BUDGET_BYTES // max(per_row, 1)) // align * align)
    Ba = _round_up(B, align)
    num_tiles = max(1, _cdiv(Ba, max_rows))
    tile_b = _round_up(_cdiv(Ba, num_tiles), align)   # balanced tiles, minimal padding
    return tile_b, tile_b * num_tiles, num_tiles


def _compiler_params():
    return pltpu.CompilerParams(
        dimension_semantics=("parallel",),
        vmem_limit_bytes=_VMEM_LIMIT_BYTES,
    )


def _int_pow(a, n):
    """|x|**n for integer n>=1 via repeated multiplies (VALU only, no EUP)."""
    out = None
    base = a
    while True:
        if n & 1:
            out = base if out is None else out * base
        n >>= 1
        if n == 0:
            break
        base = base * base
    return out


def _row_stats(x, *, p, center, eps):
    """Per-row (mean, inv_norm, centered_x) for an f32 (tile_b, D) block."""
    if center:
        mean = jnp.mean(x, axis=-1, keepdims=True)
        xc = x - mean
    else:
        mean = jnp.zeros((x.shape[0], 1), jnp.float32)
        xc = x

    if p == 0:
        inv_norm = jnp.ones((x.shape[0], 1), jnp.float32)
    else:
        if p == 2:
            norm = jnp.sqrt(jnp.sum(xc * xc, axis=-1, keepdims=True))
        elif p == 1:
            norm = jnp.sum(jnp.abs(xc), axis=-1, keepdims=True)
        else:
            a = jnp.abs(xc)
            pf = float(p)
            if pf.is_integer() and 2 < int(pf) <= 16:
                ap = _int_pow(a, int(pf))          # multiplies, not exp(p*log|x|)
            else:
                ap = a ** p
            norm = jnp.sum(ap, axis=-1, keepdims=True) ** (1.0 / p)
        # One per-row reciprocal; the big block only sees broadcast multiplies.
        inv_norm = 1.0 / jnp.maximum(norm, eps)
    return mean, inv_norm, xc


def _pnorm_kernel(x_ref, o_ref, *, p, center, eps):
    """Single-pass kernel (no temperature estimation)."""
    x = x_ref[...].astype(jnp.float32)
    _, inv_norm, xc = _row_stats(x, p=p, center=center, eps=eps)
    o_ref[...] = (xc * inv_norm).astype(o_ref.dtype)


def _stats_kernel(x_ref, mean_ref, inv_ref, ysum_ref, *, p, center, eps):
    """Pass 1 of the temperature path: only tiny per-row statistics are written."""
    x = x_ref[...].astype(jnp.float32)
    mean, inv_norm, xc = _row_stats(x, p=p, center=center, eps=eps)
    mean_ref[...] = mean
    inv_ref[...] = inv_norm
    ysum_ref[...] = jnp.sum(xc, axis=-1, keepdims=True) * inv_norm


def _apply_kernel(inv_tau_ref, x_ref, mean_ref, inv_ref, o_ref, *, center):
    """Pass 2 of the temperature path: out = (x - mean) * inv_norm * inv_tau."""
    inv_tau = inv_tau_ref[0, 0]                      # SMEM scalar
    x = x_ref[...].astype(jnp.float32)
    if center:
        x = x - mean_ref[...]
    scale = inv_ref[...] * inv_tau                   # (tile_b, 1) per-row scale
    o_ref[...] = (x * scale).astype(o_ref.dtype)


def pnorm(x, *, p=2, center=False, estimate_temperature=False, eps=1e-12):
    """Pallas implementation of PNorm.forward for 2-D logits [B, D]."""
    B, D = x.shape
    itemsize = jnp.dtype(x.dtype).itemsize
    tile_b, B_pad, num_tiles = _pick_tiling(B, D, itemsize)

    # Zero rows are inert: mean=0, norm clamps to eps, normalized row is 0 and
    # contributes 0 to the temperature sum.
    xp = x if B_pad == B else jnp.pad(x, ((0, B_pad - B), (0, 0)))
    grid = (num_tiles,)

    # NOTE: if D < 128 the output stores are lane-masked; padding D at the JAX
    # level would trade that for extra HBM traffic, so we keep D as-is.
    row_spec = pl.BlockSpec((tile_b, D), lambda i: (i, 0))
    col_spec = pl.BlockSpec((tile_b, 1), lambda i: (i, 0))

    if not estimate_temperature:
        y = pl.pallas_call(
            functools.partial(_pnorm_kernel, p=p, center=center, eps=eps),
            out_shape=jax.ShapeDtypeStruct((B_pad, D), x.dtype),
            grid=grid,
            in_specs=[row_spec],
            out_specs=row_spec,
            compiler_params=_compiler_params(),
        )(xp)
        return y if B_pad == B else y[:B]

    # --- Pass 1: per-row statistics only (no y materialized to HBM). ---
    mean, inv_norm, row_ysum = pl.pallas_call(
        functools.partial(_stats_kernel, p=p, center=center, eps=eps),
        out_shape=(
            jax.ShapeDtypeStruct((B_pad, 1), jnp.float32),
            jax.ShapeDtypeStruct((B_pad, 1), jnp.float32),
            jax.ShapeDtypeStruct((B_pad, 1), jnp.float32),
        ),
        grid=grid,
        in_specs=[row_spec],
        out_specs=(col_spec, col_spec, col_spec),
        compiler_params=_compiler_params(),
    )(xp)

    # pred_tau = mean of the normalized logits over the *original* B*D entries.
    pred_tau = jnp.sum(row_ysum) / jnp.float32(B * D)
    inv_tau = (1.0 / pred_tau).reshape(1, 1).astype(jnp.float32)

    # --- Pass 2: re-read x, apply per-row scale and 1/pred_tau. ---
    out = pl.pallas_call(
        functools.partial(_apply_kernel, center=center),
        out_shape=jax.ShapeDtypeStruct((B_pad, D), x.dtype),
        grid=grid,
        in_specs=[
            pl.BlockSpec(memory_space=pltpu.MemorySpace.SMEM),
            row_spec,
            col_spec,
            col_spec,
        ],
        out_specs=row_spec,
        compiler_params=_compiler_params(),
    )(inv_tau, xp, mean, inv_norm)
    return out if B_pad == B else out[:B]


def pnorm_ref(x, *, p=2, center=False, estimate_temperature=False, eps=1e-12):
    """Pure-JAX reference mirroring PNorm.forward."""
    x = x.astype(jnp.float32)
    if center:
        x = x - jnp.mean(x, axis=-1, keepdims=True)
    if p == 0:
        norm = jnp.ones((x.shape[0], 1), jnp.float32)
    elif p == 2:
        norm = jnp.maximum(jnp.sqrt(jnp.sum(x * x, axis=-1, keepdims=True)), eps)
    elif p == 1:
        norm = jnp.maximum(jnp.sum(jnp.abs(x), axis=-1, keepdims=True), eps)
    else:
        norm = jnp.maximum(
            jnp.sum(jnp.abs(x) ** p, axis=-1, keepdims=True) ** (1.0 / p), eps)
    y = x / norm
    tau = jnp.mean(y) if estimate_temperature else 1.0
    return y / tau


if __name__ == "__main__":
    key = jax.random.PRNGKey(0)
    k1, k2, k3 = jax.random.split(key, 3)
    B, D = 8, 32  # small synthetic logits: batch=8, num_classes=32
    x = jax.random.normal(k1, (B, D), dtype=jnp.float32) * 3.0

    # No-temperature configs (exactly match the reference).
    for cfg in (
        dict(p=2, center=False, estimate_temperature=False),
        dict(p=2, center=True, estimate_temperature=False),
        dict(p=1, center=False, estimate_temperature=False),
        dict(p=3, center=False, estimate_temperature=False),  # integer-p fast path
        dict(p=0, center=True, estimate_temperature=False),
    ):
        y = jax.block_until_ready(pnorm(x, **cfg))
        r = pnorm_ref(x, **cfg)
        assert jnp.allclose(y, r, atol=1e-5, rtol=1e-5), f"mismatch: {cfg}"

    # Temperature estimation: use logits with a nonzero mean so pred_tau is
    # well away from 0 (when center=True, mean(y) ~= 0 and the final division
    # is ill-conditioned in BOTH the kernel and the reference, so an
    # element-wise comparison there is meaningless).
    xt = jax.random.normal(k2, (B, D), dtype=jnp.float32) * 2.0 + 1.5
    yt = jax.block_until_ready(pnorm(xt, p=2, estimate_temperature=True))
    rt = pnorm_ref(xt, p=2, estimate_temperature=True)
    assert jnp.allclose(yt, rt, atol=1e-4, rtol=1e-4), "temperature mismatch"

    # Batch not a multiple of the tile (exercises the zero-row padding path).
    x3 = jax.random.normal(k3, (12, D), dtype=jnp.float32) * 2.0 + 1.0
    y3 = jax.block_until_ready(pnorm(x3, p=2, center=True))
    r3 = pnorm_ref(x3, p=2, center=True)
    assert jnp.allclose(y3, r3, atol=1e-5, rtol=1e-5), "padded-batch mismatch"

    y4 = jax.block_until_ready(pnorm(x3, p=1, estimate_temperature=True))
    r4 = pnorm_ref(x3, p=1, estimate_temperature=True)
    assert jnp.allclose(y4, r4, atol=1e-4, rtol=1e-4), "padded-batch tau mismatch"

    print("KERNEL_OK")
</pallas_src>

<mosaic_0001>
module attributes {stable_mosaic.version = 11 : i64} {
  func.func @_pnorm_kernel(%arg0: i32, %arg1: memref<8x32xf32, #tpu.memory_space<vmem>>, %arg2: memref<8x32xf32, #tpu.memory_space<vmem>>) attributes {dimension_semantics = [#tpu.dimension_semantics<parallel>], iteration_bounds = array<i64: 1>, scalar_prefetch = 0 : i64, scratch_operands = 0 : i64, tpu.core_type = #tpu.core_type<tc>, window_params = [{transform_indices = @transform_0, window_bounds = array<i64: 8, 32>}, {transform_indices = @transform_1, window_bounds = array<i64: 8, 32>}]} {
    %c0 = arith.constant 0 : index
    %c0_0 = arith.constant 0 : index
    %0 = vector.load %arg1[%c0, %c0_0] : memref<8x32xf32, #tpu.memory_space<vmem>>, vector<8x32xf32>
    %1 = arith.mulf %0, %0 : vector<8x32xf32>
    %cst = arith.constant dense<0.000000e+00> : vector<8xf32>
    %2 = vector.multi_reduction <add>, %1, %cst [1] : vector<8x32xf32> to vector<8xf32>
    %3 = vector.shape_cast %2 : vector<8xf32> to vector<8x1xf32>
    %4 = math.sqrt %3 : vector<8x1xf32>
    %cst_1 = arith.constant 9.99999996E-13 : f32
    %5 = vector.broadcast %cst_1 : f32 to vector<8x1xf32>
    %6 = arith.maximumf %4, %5 : vector<8x1xf32>
    %cst_2 = arith.constant 1.000000e+00 : f32
    %7 = vector.broadcast %cst_2 : f32 to vector<8x1xf32>
    %8 = arith.divf %7, %6 : vector<8x1xf32>
    %9 = vector.broadcast %8 : vector<8x1xf32> to vector<8x32xf32>
    %10 = arith.mulf %0, %9 : vector<8x32xf32>
    %c0_3 = arith.constant 0 : index
    %c0_4 = arith.constant 0 : index
    %11 = vector.load %arg2[%c0_3, %c0_4] : memref<8x32xf32, #tpu.memory_space<vmem>>, vector<8x32xf32>
    tpu.vector_store %arg2[%c0_3, %c0_4], %10 {strides = array<i32>} : memref<8x32xf32, #tpu.memory_space<vmem>>, vector<8x32xf32>,
    return
  }
  func.func @transform_0(%arg0: i32) -> (i32, i32) {
    %c0_i32 = arith.constant 0 : i32
    %c0_i32_0 = arith.constant 0 : i32
    return %arg0, %c0_i32 : i32, i32
  }
  func.func @transform_1(%arg0: i32) -> (i32, i32) {
    %c0_i32 = arith.constant 0 : i32
    %c0_i32_0 = arith.constant 0 : i32
    return %arg0, %c0_i32 : i32, i32
  }
}

</mosaic_0001>

<llo_original>
// kernel: tpu_custom_call.1
$region0: #{tpu_custom_call.1}
  #allocation0 [shape = 'u32[]', space=smem, size = 0x4, offset = 0x4, fixed_abs, tag = 'smem constant byte address 0x4 - core index']
  #allocation1 [shape = 'u32[144,128]{1,0:T(1,128)}', space=vmem, size = 0x12000, scoped, tag = 'internal scratch']
  %s0 = inlined_call_operand.hbm [shape: f32[8,32], index: 0, kind: input, shape index: {}]
  %s1 = inlined_call_operand.hbm [shape: f32[8,32], index: 1, kind: output, shape index: {}]
  %s2 = sld [smem:[#allocation0]]
  $region18: #{tpu_custom_call.1} parent=0
    _
  %s4 = ssub.s32 1, %s2
  %s5 = scalar_select 0, %s4, %s2
  $region1: #{tpu_custom_call.1} parent=0
    #allocation2 [shape = 'u8[4096]{0}', space=vmem, size = 0x1000, scoped, tag = 'input window, operand 0, single buffered']
    #allocation3 [shape = 's32[1]{0}', space=sflag, size = 0x4, scoped, tag = 'scoped memory for tpu_custom_call.1']
    #allocation4 [shape = 's32[1]{0}', space=sflag, size = 0x4, scoped, tag = 'scoped memory for tpu_custom_call.1']
    #allocation5 [shape = 'u8[4096]{0}', space=vmem, size = 0x1000, scoped, tag = 'output window, operand 0, single buffered']
    %6 = vsyncpa [#allocation3], 0
    %7 = vsyncpa [#allocation4], 0
    // Predicated region
    $region2: #{tpu_custom_call.1} parent=1 // pred_check
      _
    $region3: #{tpu_custom_call.1} parent=1 // pred_check_branch
      %9 = sbr.rel (0) target = $region5
    $region4: #{tpu_custom_call.1} parent=1 // pred_region
      %s11 = ssub.s32 128, 128
      %12 = vsyncadd [#allocation3], %s11
      %s14 = sshll.u32 [#allocation2], 4
      %s15 = int_to_ptr.vmem [resolvable:$true] %s14
      %17 = dma.hbm_to_vmem [thread:$0]  %s0, 128, %s15, [#allocation3]
    $region5: #{tpu_custom_call.1} parent=1 // pred_fallthru
      _
    // Predicated region
    $region6: #{tpu_custom_call.1} parent=1 // pred_check
      _
    $region7: #{tpu_custom_call.1} parent=1 // pred_check_branch
      %19 = sbr.rel (0) target = $region9
    $region8: #{tpu_custom_call.1} parent=1 // pred_region
      %20 = dma.done [#allocation3], 128
    $region9: #{tpu_custom_call.1} parent=1 // pred_fallthru
      _
    %v21 = vld [vmem:[#allocation2] sm:$0xff]
    %v22 = vmul.f32 %v21, %v21
    %vm23 = vcmask 261120
    %v24 = vsel %vm23, %v22, 0.0
    %25 = vadd.xlane.f32.xlu0 %v24
    %v26 = vpop.xlane.xlu0 %25
    %v27 = vrsqrt.pop %v26
    %v28 = vmul.f32 %v26, %v27
    %vm29 = vcmp.eq.f32.partialorder %v26, inf
    %v30 = vsel %vm29, %v26, %v28
    %vm31 = vcmp.eq.f32.partialorder %v26, 0.0
    %v32 = vand.u32 %v26, 2147483648
    %v33 = vsel %vm31, %v32, %v30
    %v34 = vmax.f32 %v33, 1e-12
    %v35 = vrcp.pop %v34
    %v36 = vmul.f32 1.0, %v35
    %v37 = vmul.f32 %v21, %v36
    %38 = vst.msk [vmem:[#allocation5] sm:$0xff] %vm23, %v37
    // Predicated region
    $region10: #{tpu_custom_call.1} parent=1 // pred_check
      _
    $region11: #{tpu_custom_call.1} parent=1 // pred_check_branch
      %40 = sbr.rel (0) target = $region13
    $region12: #{tpu_custom_call.1} parent=1 // pred_region
      %s42 = ssub.s32 128, 128
      %43 = vsyncadd [#allocation4], %s42
      %s45 = sshll.u32 [#allocation5], 4
      %s46 = int_to_ptr.vmem [resolvable:$true] %s45
      %48 = dma.vmem_to_hbm [thread:$0]  %s46, 128, %s1, [#allocation4]
    $region13: #{tpu_custom_call.1} parent=1 // pred_fallthru
      _
    // Predicated region
    $region14: #{tpu_custom_call.1} parent=1 // pred_check
      _
    $region15: #{tpu_custom_call.1} parent=1 // pred_check_branch
      %50 = sbr.rel (0) target = $region17
    $region16: #{tpu_custom_call.1} parent=1 // pred_region
      %51 = dma.done [#allocation4], 128
    $region17: #{tpu_custom_call.1} parent=1 // pred_fallthru
      _
    %52 = vsyncpa [#allocation3], 1
    %53 = vsyncpa [#allocation4], 1

</llo_original>
